<compile_context>
chip_gen: v7x
topology: tpu7x:2x2x1
jax: 0.10.0
libtpu: 0.0.40
codegen_flags: <defaults>
</compile_context>

<pallas_src>
import functools

import jax
import jax.numpy as jnp
from jax.experimental import pallas as pl
from jax.experimental.pallas import tpu as pltpu

_LANE = 128
_SUBLANE = 8
_FUSED_VMEM_BUDGET = 48 << 20          # fits v5e/v6e (128 MiB) and v7x (64 MiB)
_ACT_BYTES_CAP = 512 * 1024            # keep f32 activation tile below spill knee


def _round_up(n, m):
    return (n + m - 1) // m * m


def _pad_dim(d):
    # 256-align wider dims (a 128-wide K/N only half-fills v6e/v7x's 256-wide
    # MXU); keep genuinely small dims at 128 to avoid pure wasted FLOPs.
    if d >= 192:
        return _round_up(d, 256)
    return _round_up(d, _LANE)


def _pick_feature_tile(dim_pad):
    for t in (512, 256, 128):
        if dim_pad % t == 0:
            return t
    return dim_pad


def _choose_batch_tile(batch, dmax_pad):
    b8 = _round_up(batch, _SUBLANE)
    if b8 <= 2 * _SUBLANE:
        tile = b8                                    # tiny batch: single tile
    else:
        # >=2 grid steps (v7x has 2 TensorCores; "parallel" only helps with
        # >=2 steps), capped at 512 rows (good pipeline / roofline tradeoff).
        tile = min(512, _round_up(b8 // 2, _SUBLANE))
    act_cap = max(_SUBLANE, _ACT_BYTES_CAP // (4 * dmax_pad) // _SUBLANE * _SUBLANE)
    return max(_SUBLANE, min(tile, act_cap))


def _fused_vmem_estimate(padded_params, batch_tile, din_pad, dout_pad, dmax_pad,
                         single_buffer_weights):
    wmult = 1 if single_buffer_weights else 2
    wbytes = sum(w.size * w.dtype.itemsize + b.size * b.dtype.itemsize
                 for w, b in padded_params) * wmult
    io = 2 * batch_tile * din_pad * 4 + 2 * batch_tile * dout_pad * 4
    act = 3 * batch_tile * dmax_pad * 4
    return wbytes + io + act


# ----------------------------------------------------------------------------
# Fused path: whole Linear->ReLU stack in one pallas_call, weights resident.
# ----------------------------------------------------------------------------
def _make_fused_dnn_kernel(num_layers):
    def kernel(x_ref, *refs):
        o_ref = refs[2 * num_layers]
        h = x_ref[...].astype(jnp.float32)            # (TB, Din_pad)
        for l in range(num_layers):                   # unrolled at trace time
            w = refs[2 * l][...]                      # (K_pad, N_pad) bf16
            b = refs[2 * l + 1][...]                  # (1, N_pad)  f32
            y = jnp.dot(h.astype(jnp.bfloat16), w,
                        preferred_element_type=jnp.float32)
            h = jnp.maximum(y + b, 0.0)               # f32 epilogue
        o_ref[...] = h.astype(o_ref.dtype)
    return kernel


def _const_spec(shape, single_buffer):
    if single_buffer:
        return pl.BlockSpec(shape, lambda i: (0, 0), pipeline_mode=pl.Buffered(1))
    return pl.BlockSpec(shape, lambda i: (0, 0))


def _fused_dnn(x_pad, padded_params, *, batch_tile, single_buffer_weights):
    B_pad, Din_pad = x_pad.shape
    num_layers = len(padded_params)
    Dout_pad = padded_params[-1][0].shape[1]
    dmax_pad = max(max(w.shape) for w, _ in padded_params)

    in_specs = [pl.BlockSpec((batch_tile, Din_pad), lambda i: (i, 0))]
    flat_params = []
    for w, b in padded_params:
        in_specs.append(_const_spec(w.shape, single_buffer_weights))
        in_specs.append(_const_spec(b.shape, single_buffer_weights))
        flat_params.extend((w, b))

    est = _fused_vmem_estimate(padded_params, batch_tile, Din_pad, Dout_pad,
                               dmax_pad, single_buffer_weights)
    vmem_limit = int(min(_FUSED_VMEM_BUDGET, max(est + est // 4, 8 << 20)))

    return pl.pallas_call(
        _make_fused_dnn_kernel(num_layers),
        out_shape=jax.ShapeDtypeStruct((B_pad, Dout_pad), x_pad.dtype),
        grid=(B_pad // batch_tile,),
        in_specs=in_specs,
        out_specs=pl.BlockSpec((batch_tile, Dout_pad), lambda i: (i, 0)),
        compiler_params=pltpu.CompilerParams(
            dimension_semantics=("parallel",),
            vmem_limit_bytes=vmem_limit),
    )(x_pad, *flat_params)


# ----------------------------------------------------------------------------
# Streaming fallback: one tiled matmul+bias+ReLU pallas_call per layer
# (used when the padded weights do not fit the resident-VMEM budget).
# ----------------------------------------------------------------------------
def _linear_relu_kernel(x_ref, w_ref, b_ref, o_ref, acc_ref):
    @pl.when(pl.program_id(2) == 0)
    def _():
        acc_ref[...] = jnp.zeros_like(acc_ref)

    acc_ref[...] += jnp.dot(x_ref[...].astype(jnp.bfloat16), w_ref[...],
                            preferred_element_type=jnp.float32)

    @pl.when(pl.program_id(2) == pl.num_programs(2) - 1)
    def _():
        o_ref[...] = jnp.maximum(acc_ref[...] + b_ref[...].astype(jnp.float32),
                                 0.0).astype(o_ref.dtype)


def _streamed_linear_relu(h, w, b, *, batch_tile):
    B_pad, K_pad = h.shape
    _, N_pad = w.shape
    tk = _pick_feature_tile(K_pad)
    tn = _pick_feature_tile(N_pad)
    return pl.pallas_call(
        _linear_relu_kernel,
        out_shape=jax.ShapeDtypeStruct((B_pad, N_pad), h.dtype),
        grid=(B_pad // batch_tile, N_pad // tn, K_pad // tk),
        in_specs=[pl.BlockSpec((batch_tile, tk), lambda i, j, k: (i, k)),
                  pl.BlockSpec((tk, tn), lambda i, j, k: (k, j)),
                  pl.BlockSpec((1, tn), lambda i, j, k: (0, j))],
        out_specs=pl.BlockSpec((batch_tile, tn), lambda i, j, k: (i, j)),
        scratch_shapes=[pltpu.VMEM((batch_tile, tn), jnp.float32)],
        compiler_params=pltpu.CompilerParams(
            dimension_semantics=("parallel", "parallel", "arbitrary")),
    )(h, w, b)


def _streamed_dnn(x_pad, padded_params, *, batch_tile):
    h = x_pad
    for w, b in padded_params:
        h = _streamed_linear_relu(h, w, b, batch_tile=batch_tile)
    return h


# ----------------------------------------------------------------------------
# Parameter init / padding and the public forward.
# ----------------------------------------------------------------------------
def init_dnn_params(key, hidden_units):
    """Params matching PyTorch nn.Linear init (W stored (in, out), f32)."""
    params = []
    for din, dout in zip(hidden_units[:-1], hidden_units[1:]):
        key, kw, kb = jax.random.split(key, 3)
        bound = 1.0 / jnp.sqrt(din)
        w = jax.random.uniform(kw, (din, dout), jnp.float32, -bound, bound)
        b = jax.random.uniform(kb, (1, dout), jnp.float32, -bound, bound)
        params.append((w, b))
    return params


def pad_dnn_params(params):
    """Zero-pad feature dims (128/256-aligned); W stored bf16, b stays f32."""
    padded = []
    for w, b in params:
        din, dout = w.shape
        din_p, dout_p = _pad_dim(din), _pad_dim(dout)
        w_p = jnp.zeros((din_p, dout_p), jnp.bfloat16
                        ).at[:din, :dout].set(w.astype(jnp.bfloat16))
        b_p = jnp.zeros((1, dout_p), jnp.float32).at[:, :dout].set(b)
        padded.append((w_p, b_p))
    return padded


@functools.partial(jax.jit, static_argnames=("out_features",
                                             "single_buffer_weights",
                                             "force_streaming"))
def dnn_forward(x, padded_params, *, out_features,
                single_buffer_weights=True, force_streaming=False):
    B, Din = x.shape
    Din_pad = padded_params[0][0].shape[0]
    Dout_pad = padded_params[-1][0].shape[1]
    dmax_pad = max(max(w.shape) for w, _ in padded_params)

    batch_tile = _choose_batch_tile(B, dmax_pad)
    B_pad = _round_up(B, batch_tile)

    # Skip the extra HBM round-trip when shapes are already aligned.
    if B_pad == B and Din_pad == Din:
        x_pad = x
    else:
        x_pad = jnp.zeros((B_pad, Din_pad), x.dtype).at[:B, :Din].set(x)

    est = _fused_vmem_estimate(padded_params, batch_tile, Din_pad, Dout_pad,
                               dmax_pad, single_buffer_weights)
    use_fused = (not force_streaming) and est <= _FUSED_VMEM_BUDGET
    if use_fused:
        out_pad = _fused_dnn(x_pad, padded_params, batch_tile=batch_tile,
                             single_buffer_weights=single_buffer_weights)
    else:
        out_pad = _streamed_dnn(x_pad, padded_params, batch_tile=batch_tile)

    # Dropout with p=0.0 (module default / eval mode) is the identity.
    if B_pad == B and Dout_pad == out_features:
        return out_pad
    return out_pad[:B, :out_features]


def _reference_forward(x, params):
    h = x
    for w, b in params:
        h = jnp.maximum(h @ w + b, 0.0)
    return h


if __name__ == "__main__":
    hidden_units = [32, 64, 32, 16]
    batch = 8

    key = jax.random.PRNGKey(0)
    key, kx = jax.random.split(key)
    x = jax.random.normal(kx, (batch, hidden_units[0]), jnp.float32)
    params = init_dnn_params(key, hidden_units)
    padded_params = pad_dnn_params(params)       # pad/cast once, reuse per call

    ref = _reference_forward(x, params)

    # Fused all-resident path; gracefully retry with default double-buffered
    # weight specs if this jax build rejects pl.Buffered(1).
    try:
        out = dnn_forward(x, padded_params, out_features=hidden_units[-1],
                          single_buffer_weights=True)
        jax.block_until_ready(out)
    except Exception:
        out = dnn_forward(x, padded_params, out_features=hidden_units[-1],
                          single_buffer_weights=False)
        jax.block_until_ready(out)

    assert out.shape == (batch, hidden_units[-1])
    assert jnp.allclose(out, ref, atol=5e-2, rtol=5e-2)   # bf16 matmul inputs

    # Also exercise the layer-streaming fallback (used when padded weights
    # exceed the resident-VMEM budget) to keep it verified.
    out_s = dnn_forward(x, padded_params, out_features=hidden_units[-1],
                        force_streaming=True)
    jax.block_until_ready(out_s)
    assert jnp.allclose(out_s, ref, atol=5e-2, rtol=5e-2)

    print("KERNEL_OK")
</pallas_src>

<mosaic_0001>
module attributes {stable_mosaic.version = 11 : i64} {
  func.func @kernel(%arg0: i32, %arg1: memref<8x128xf32, #tpu.memory_space<vmem>>, %arg2: memref<128x128xbf16, #tpu.memory_space<vmem>>, %arg3: memref<1x128xf32, #tpu.memory_space<vmem>>, %arg4: memref<128x128xbf16, #tpu.memory_space<vmem>>, %arg5: memref<1x128xf32, #tpu.memory_space<vmem>>, %arg6: memref<128x128xbf16, #tpu.memory_space<vmem>>, %arg7: memref<1x128xf32, #tpu.memory_space<vmem>>, %arg8: memref<8x128xf32, #tpu.memory_space<vmem>>) attributes {dimension_semantics = [#tpu.dimension_semantics<parallel>], iteration_bounds = array<i64: 1>, scalar_prefetch = 0 : i64, scratch_operands = 0 : i64, tpu.core_type = #tpu.core_type<tc>, window_params = [{transform_indices = @transform_0, window_bounds = array<i64: 8, 128>}, {pipeline_mode = #tpu.pipeline_mode<synchronous>, transform_indices = @transform_1, window_bounds = array<i64: 128, 128>}, {pipeline_mode = #tpu.pipeline_mode<synchronous>, transform_indices = @transform_2, window_bounds = array<i64: 1, 128>}, {pipeline_mode = #tpu.pipeline_mode<synchronous>, transform_indices = @transform_3, window_bounds = array<i64: 128, 128>}, {pipeline_mode = #tpu.pipeline_mode<synchronous>, transform_indices = @transform_4, window_bounds = array<i64: 1, 128>}, {pipeline_mode = #tpu.pipeline_mode<synchronous>, transform_indices = @transform_5, window_bounds = array<i64: 128, 128>}, {pipeline_mode = #tpu.pipeline_mode<synchronous>, transform_indices = @transform_6, window_bounds = array<i64: 1, 128>}, {transform_indices = @transform_7, window_bounds = array<i64: 8, 128>}]} {
    %c0 = arith.constant 0 : index
    %c0_0 = arith.constant 0 : index
    %0 = vector.load %arg1[%c0, %c0_0] : memref<8x128xf32, #tpu.memory_space<vmem>>, vector<8x128xf32>
    %c0_1 = arith.constant 0 : index
    %c0_2 = arith.constant 0 : index
    %1 = vector.load %arg2[%c0_1, %c0_2] : memref<128x128xbf16, #tpu.memory_space<vmem>>, vector<128x128xbf16>
    %c0_3 = arith.constant 0 : index
    %c0_4 = arith.constant 0 : index
    %2 = vector.load %arg3[%c0_3, %c0_4] : memref<1x128xf32, #tpu.memory_space<vmem>>, vector<1x128xf32>
    %3 = arith.truncf %0 : vector<8x128xf32> to vector<8x128xbf16>
    %cst = arith.constant dense<0.000000e+00> : vector<8x128xf32>
    %4 = tpu.matmul %3, %1, %cst {dimension_numbers = #tpu.dot_dimension_numbers<[1], [0], [0], [1], [0, 0, 1, 1], [], []>} : vector<8x128xbf16>, vector<128x128xbf16>, vector<8x128xf32> -> vector<8x128xf32>
    %5 = vector.broadcast %2 : vector<1x128xf32> to vector<8x128xf32>
    %6 = arith.addf %4, %5 : vector<8x128xf32>
    %cst_5 = arith.constant 0.000000e+00 : f32
    %7 = vector.broadcast %cst_5 : f32 to vector<8x128xf32>
    %8 = arith.maximumf %6, %7 : vector<8x128xf32>
    %c0_6 = arith.constant 0 : index
    %c0_7 = arith.constant 0 : index
    %9 = vector.load %arg4[%c0_6, %c0_7] : memref<128x128xbf16, #tpu.memory_space<vmem>>, vector<128x128xbf16>
    %c0_8 = arith.constant 0 : index
    %c0_9 = arith.constant 0 : index
    %10 = vector.load %arg5[%c0_8, %c0_9] : memref<1x128xf32, #tpu.memory_space<vmem>>, vector<1x128xf32>
    %11 = arith.truncf %8 : vector<8x128xf32> to vector<8x128xbf16>
    %cst_10 = arith.constant dense<0.000000e+00> : vector<8x128xf32>
    %12 = tpu.matmul %11, %9, %cst_10 {dimension_numbers = #tpu.dot_dimension_numbers<[1], [0], [0], [1], [0, 0, 1, 1], [], []>} : vector<8x128xbf16>, vector<128x128xbf16>, vector<8x128xf32> -> vector<8x128xf32>
    %13 = vector.broadcast %10 : vector<1x128xf32> to vector<8x128xf32>
    %14 = arith.addf %12, %13 : vector<8x128xf32>
    %cst_11 = arith.constant 0.000000e+00 : f32
    %15 = vector.broadcast %cst_11 : f32 to vector<8x128xf32>
    %16 = arith.maximumf %14, %15 : vector<8x128xf32>
    %c0_12 = arith.constant 0 : index
    %c0_13 = arith.constant 0 : index
    %17 = vector.load %arg6[%c0_12, %c0_13] : memref<128x128xbf16, #tpu.memory_space<vmem>>, vector<128x128xbf16>
    %c0_14 = arith.constant 0 : index
    %c0_15 = arith.constant 0 : index
    %18 = vector.load %arg7[%c0_14, %c0_15] : memref<1x128xf32, #tpu.memory_space<vmem>>, vector<1x128xf32>
    %19 = arith.truncf %16 : vector<8x128xf32> to vector<8x128xbf16>
    %cst_16 = arith.constant dense<0.000000e+00> : vector<8x128xf32>
    %20 = tpu.matmul %19, %17, %cst_16 {dimension_numbers = #tpu.dot_dimension_numbers<[1], [0], [0], [1], [0, 0, 1, 1], [], []>} : vector<8x128xbf16>, vector<128x128xbf16>, vector<8x128xf32> -> vector<8x128xf32>
    %21 = vector.broadcast %18 : vector<1x128xf32> to vector<8x128xf32>
    %22 = arith.addf %20, %21 : vector<8x128xf32>
    %cst_17 = arith.constant 0.000000e+00 : f32
    %23 = vector.broadcast %cst_17 : f32 to vector<8x128xf32>
    %24 = arith.maximumf %22, %23 : vector<8x128xf32>
    %c0_18 = arith.constant 0 : index
    %c0_19 = arith.constant 0 : index
    %25 = vector.load %arg8[%c0_18, %c0_19] : memref<8x128xf32, #tpu.memory_space<vmem>>, vector<8x128xf32>
    tpu.vector_store %arg8[%c0_18, %c0_19], %24 {strides = array<i32>} : memref<8x128xf32, #tpu.memory_space<vmem>>, vector<8x128xf32>,
    return
  }
  func.func @transform_0(%arg0: i32) -> (i32, i32) {
    %c0_i32 = arith.constant 0 : i32
    %c0_i32_0 = arith.constant 0 : i32
    return %arg0, %c0_i32 : i32, i32
  }
  func.func @transform_1(%arg0: i32) -> (i32, i32) {
    %c0_i32 = arith.constant 0 : i32
    %c0_i32_0 = arith.constant 0 : i32
    %c0_i32_1 = arith.constant 0 : i32
    return %c0_i32, %c0_i32_0 : i32, i32
  }
  func.func @transform_2(%arg0: i32) -> (i32, i32) {
    %c0_i32 = arith.constant 0 : i32
    %c0_i32_0 = arith.constant 0 : i32
    %c0_i32_1 = arith.constant 0 : i32
    return %c0_i32, %c0_i32_0 : i32, i32
  }
  func.func @transform_3(%arg0: i32) -> (i32, i32) {
    %c0_i32 = arith.constant 0 : i32
    %c0_i32_0 = arith.constant 0 : i32
    %c0_i32_1 = arith.constant 0 : i32
    return %c0_i32, %c0_i32_0 : i32, i32
  }
  func.func @transform_4(%arg0: i32) -> (i32, i32) {
    %c0_i32 = arith.constant 0 : i32
    %c0_i32_0 = arith.constant 0 : i32
    %c0_i32_1 = arith.constant 0 : i32
    return %c0_i32, %c0_i32_0 : i32, i32
  }
  func.func @transform_5(%arg0: i32) -> (i32, i32) {
    %c0_i32 = arith.constant 0 : i32
    %c0_i32_0 = arith.constant 0 : i32
    %c0_i32_1 = arith.constant 0 : i32
    return %c0_i32, %c0_i32_0 : i32, i32
  }
  func.func @transform_6(%arg0: i32) -> (i32, i32) {
    %c0_i32 = arith.constant 0 : i32
    %c0_i32_0 = arith.constant 0 : i32
    %c0_i32_1 = arith.constant 0 : i32
    return %c0_i32, %c0_i32_0 : i32, i32
  }
  func.func @transform_7(%arg0: i32) -> (i32, i32) {
    %c0_i32 = arith.constant 0 : i32
    %c0_i32_0 = arith.constant 0 : i32
    return %arg0, %c0_i32 : i32, i32
  }
}

module attributes {stable_mosaic.version = 11 : i64} {
  func.func @kernel(%arg0: i32, %arg1: memref<8x128xf32, #tpu.memory_space<vmem>>, %arg2: memref<128x128xbf16, #tpu.memory_space<vmem>>, %arg3: memref<1x128xf32, #tpu.memory_space<vmem>>, %arg4: memref<128x128xbf16, #tpu.memory_space<vmem>>, %arg5: memref<1x128xf32, #tpu.memory_space<vmem>>, %arg6: memref<128x128xbf16, #tpu.memory_space<vmem>>, %arg7: memref<1x128xf32, #tpu.memory_space<vmem>>, %arg8: memref<8x128xf32, #tpu.memory_space<vmem>>) attributes {dimension_semantics = [#tpu.dimension_semantics<parallel>], iteration_bounds = array<i64: 1>, scalar_prefetch = 0 : i64, scratch_operands = 0 : i64, tpu.core_type = #tpu.core_type<tc>, window_params = [{transform_indices = @transform_0, window_bounds = array<i64: 8, 128>}, {pipeline_mode = #tpu.pipeline_mode<synchronous>, transform_indices = @transform_1, window_bounds = array<i64: 128, 128>}, {pipeline_mode = #tpu.pipeline_mode<synchronous>, transform_indices = @transform_2, window_bounds = array<i64: 1, 128>}, {pipeline_mode = #tpu.pipeline_mode<synchronous>, transform_indices = @transform_3, window_bounds = array<i64: 128, 128>}, {pipeline_mode = #tpu.pipeline_mode<synchronous>, transform_indices = @transform_4, window_bounds = array<i64: 1, 128>}, {pipeline_mode = #tpu.pipeline_mode<synchronous>, transform_indices = @transform_5, window_bounds = array<i64: 128, 128>}, {pipeline_mode = #tpu.pipeline_mode<synchronous>, transform_indices = @transform_6, window_bounds = array<i64: 1, 128>}, {transform_indices = @transform_7, window_bounds = array<i64: 8, 128>}]} {
    %c0 = arith.constant 0 : index
    %c0_0 = arith.constant 0 : index
    %0 = vector.load %arg1[%c0, %c0_0] : memref<8x128xf32, #tpu.memory_space<vmem>>, vector<8x128xf32>
    %c0_1 = arith.constant 0 : index
    %c0_2 = arith.constant 0 : index
    %1 = vector.load %arg2[%c0_1, %c0_2] : memref<128x128xbf16, #tpu.memory_space<vmem>>, vector<128x128xbf16>
    %c0_3 = arith.constant 0 : index
    %c0_4 = arith.constant 0 : index
    %2 = vector.load %arg3[%c0_3, %c0_4] : memref<1x128xf32, #tpu.memory_space<vmem>>, vector<1x128xf32>
    %3 = arith.truncf %0 : vector<8x128xf32> to vector<8x128xbf16>
    %cst = arith.constant dense<0.000000e+00> : vector<8x128xf32>
    %4 = tpu.matmul %3, %1, %cst {dimension_numbers = #tpu.dot_dimension_numbers<[1], [0], [0], [1], [0, 0, 1, 1], [], []>} : vector<8x128xbf16>, vector<128x128xbf16>, vector<8x128xf32> -> vector<8x128xf32>
    %5 = vector.broadcast %2 : vector<1x128xf32> to vector<8x128xf32>
    %6 = arith.addf %4, %5 : vector<8x128xf32>
    %cst_5 = arith.constant 0.000000e+00 : f32
    %7 = vector.broadcast %cst_5 : f32 to vector<8x128xf32>
    %8 = arith.maximumf %6, %7 : vector<8x128xf32>
    %c0_6 = arith.constant 0 : index
    %c0_7 = arith.constant 0 : index
    %9 = vector.load %arg4[%c0_6, %c0_7] : memref<128x128xbf16, #tpu.memory_space<vmem>>, vector<128x128xbf16>
    %c0_8 = arith.constant 0 : index
    %c0_9 = arith.constant 0 : index
    %10 = vector.load %arg5[%c0_8, %c0_9] : memref<1x128xf32, #tpu.memory_space<vmem>>, vector<1x128xf32>
    %11 = arith.truncf %8 : vector<8x128xf32> to vector<8x128xbf16>
    %cst_10 = arith.constant dense<0.000000e+00> : vector<8x128xf32>
    %12 = tpu.matmul %11, %9, %cst_10 {dimension_numbers = #tpu.dot_dimension_numbers<[1], [0], [0], [1], [0, 0, 1, 1], [], []>} : vector<8x128xbf16>, vector<128x128xbf16>, vector<8x128xf32> -> vector<8x128xf32>
    %13 = vector.broadcast %10 : vector<1x128xf32> to vector<8x128xf32>
    %14 = arith.addf %12, %13 : vector<8x128xf32>
    %cst_11 = arith.constant 0.000000e+00 : f32
    %15 = vector.broadcast %cst_11 : f32 to vector<8x128xf32>
    %16 = arith.maximumf %14, %15 : vector<8x128xf32>
    %c0_12 = arith.constant 0 : index
    %c0_13 = arith.constant 0 : index
    %17 = vector.load %arg6[%c0_12, %c0_13] : memref<128x128xbf16, #tpu.memory_space<vmem>>, vector<128x128xbf16>
    %c0_14 = arith.constant 0 : index
    %c0_15 = arith.constant 0 : index
    %18 = vector.load %arg7[%c0_14, %c0_15] : memref<1x128xf32, #tpu.memory_space<vmem>>, vector<1x128xf32>
    %19 = arith.truncf %16 : vector<8x128xf32> to vector<8x128xbf16>
    %cst_16 = arith.constant dense<0.000000e+00> : vector<8x128xf32>
    %20 = tpu.matmul %19, %17, %cst_16 {dimension_numbers = #tpu.dot_dimension_numbers<[1], [0], [0], [1], [0, 0, 1, 1], [], []>} : vector<8x128xbf16>, vector<128x128xbf16>, vector<8x128xf32> -> vector<8x128xf32>
    %21 = vector.broadcast %18 : vector<1x128xf32> to vector<8x128xf32>
    %22 = arith.addf %20, %21 : vector<8x128xf32>
    %cst_17 = arith.constant 0.000000e+00 : f32
    %23 = vector.broadcast %cst_17 : f32 to vector<8x128xf32>
    %24 = arith.maximumf %22, %23 : vector<8x128xf32>
    %c0_18 = arith.constant 0 : index
    %c0_19 = arith.constant 0 : index
    %25 = vector.load %arg8[%c0_18, %c0_19] : memref<8x128xf32, #tpu.memory_space<vmem>>, vector<8x128xf32>
    tpu.vector_store %arg8[%c0_18, %c0_19], %24 {strides = array<i32>} : memref<8x128xf32, #tpu.memory_space<vmem>>, vector<8x128xf32>,
    return
  }
  func.func @transform_0(%arg0: i32) -> (i32, i32) {
    %c0_i32 = arith.constant 0 : i32
    %c0_i32_0 = arith.constant 0 : i32
    return %arg0, %c0_i32 : i32, i32
  }
  func.func @transform_1(%arg0: i32) -> (i32, i32) {
    %c0_i32 = arith.constant 0 : i32
    %c0_i32_0 = arith.constant 0 : i32
    %c0_i32_1 = arith.constant 0 : i32
    return %c0_i32, %c0_i32_0 : i32, i32
  }
  func.func @transform_2(%arg0: i32) -> (i32, i32) {
    %c0_i32 = arith.constant 0 : i32
    %c0_i32_0 = arith.constant 0 : i32
    %c0_i32_1 = arith.constant 0 : i32
    return %c0_i32, %c0_i32_0 : i32, i32
  }
  func.func @transform_3(%arg0: i32) -> (i32, i32) {
    %c0_i32 = arith.constant 0 : i32
    %c0_i32_0 = arith.constant 0 : i32
    %c0_i32_1 = arith.constant 0 : i32
    return %c0_i32, %c0_i32_0 : i32, i32
  }
  func.func @transform_4(%arg0: i32) -> (i32, i32) {
    %c0_i32 = arith.constant 0 : i32
    %c0_i32_0 = arith.constant 0 : i32
    %c0_i32_1 = arith.constant 0 : i32
    return %c0_i32, %c0_i32_0 : i32, i32
  }
  func.func @transform_5(%arg0: i32) -> (i32, i32) {
    %c0_i32 = arith.constant 0 : i32
    %c0_i32_0 = arith.constant 0 : i32
    %c0_i32_1 = arith.constant 0 : i32
    return %c0_i32, %c0_i32_0 : i32, i32
  }
  func.func @transform_6(%arg0: i32) -> (i32, i32) {
    %c0_i32 = arith.constant 0 : i32
    %c0_i32_0 = arith.constant 0 : i32
    %c0_i32_1 = arith.constant 0 : i32
    return %c0_i32, %c0_i32_0 : i32, i32
  }
  func.func @transform_7(%arg0: i32) -> (i32, i32) {
    %c0_i32 = arith.constant 0 : i32
    %c0_i32_0 = arith.constant 0 : i32
    return %arg0, %c0_i32 : i32, i32
  }
}

</mosaic_0001>

<llo_original>
// kernel: dnn_forward.1
$region0: #{dnn_forward.1}
  #allocation0 [shape = 'u32[]', space=smem, size = 0x4, offset = 0x4, fixed_abs, tag = 'smem constant byte address 0x4 - core index']
  #allocation1 [shape = 'u32[144,128]{1,0:T(1,128)}', space=vmem, size = 0x12000, scoped, tag = 'internal scratch']
  %s0 = inlined_call_operand.vmem [shape: f32[8,128], index: 0, kind: input, shape index: {}]
  %s1 = inlined_call_operand.hbm [shape: bf16[128,128], index: 1, kind: input, shape index: {}]
  %s2 = inlined_call_operand.vmem [shape: f32[1,128], index: 2, kind: input, shape index: {}]
  %s3 = inlined_call_operand.hbm [shape: bf16[128,128], index: 3, kind: input, shape index: {}]
  %s4 = inlined_call_operand.vmem [shape: f32[1,128], index: 4, kind: input, shape index: {}]
  %s5 = inlined_call_operand.hbm [shape: bf16[128,128], index: 5, kind: input, shape index: {}]
  %s6 = inlined_call_operand.vmem [shape: f32[1,128], index: 6, kind: input, shape index: {}]
  %s7 = inlined_call_operand.hbm [shape: f32[8,128], index: 7, kind: output, shape index: {}]
  %s8 = sld [smem:[#allocation0]]
  $region50: #{dnn_forward.1} parent=0
    _
  %s10 = ssub.s32 1, %s8
  %s11 = scalar_select 0, %s10, %s8
  $region1: #{dnn_forward.1} parent=0
    #allocation2 [shape = 'u8[32768]{0}', space=vmem, size = 0x8000, scoped, tag = 'input window, operand 1, single buffered']
    #allocation3 [shape = 's32[1]{0}', space=sflag, size = 0x4, scoped, tag = 'scoped memory for dnn_forward.1']
    #allocation4 [shape = 's32[1]{0}', space=sflag, size = 0x4, scoped, tag = 'scoped memory for dnn_forward.1']
    #allocation5 [shape = 'u8[32768]{0}', space=vmem, size = 0x8000, scoped, tag = 'input window, operand 3, single buffered']
    #allocation6 [shape = 's32[1]{0}', space=sflag, size = 0x4, scoped, tag = 'scoped memory for dnn_forward.1']
    #allocation7 [shape = 'u8[32768]{0}', space=vmem, size = 0x8000, scoped, tag = 'input window, operand 5, single buffered']
    #allocation8 [shape = 'u8[4096]{0}', space=vmem, size = 0x1000, scoped, tag = 'output window, operand 0, single buffered']
    %12 = vsyncpa [#allocation3], 0
    %13 = vsyncpa [#allocation6], 0
    %14 = vsyncpa [#allocation4], 0
    // Predicated region
    $region2: #{dnn_forward.1} parent=1 // pred_check
      _
    $region3: #{dnn_forward.1} parent=1 // pred_check_branch
      %16 = sbr.rel (0) target = $region5
    $region4: #{dnn_forward.1} parent=1 // pred_region
      _
    $region5: #{dnn_forward.1} parent=1 // pred_fallthru
      _
    // Predicated region
    $region6: #{dnn_forward.1} parent=1 // pred_check
      _
    $region7: #{dnn_forward.1} parent=1 // pred_check_branch
      %18 = sbr.rel (0) target = $region9
    $region8: #{dnn_forward.1} parent=1 // pred_region
      %s20 = ssub.s32 1024, 1024
      %21 = vsyncadd [#allocation3], %s20
      %s22 = sshll.u32 [#allocation2], 4
      %s23 = int_to_ptr.vmem [resolvable:$true] %s22
      %28 = dma.hbm_to_vmem [thread:$0]  %s1, 1024, %s23, [#allocation3], 64, 64, 4
    $region9: #{dnn_forward.1} parent=1 // pred_fallthru
      _
    // Predicated region
    $region10: #{dnn_forward.1} parent=1 // pred_check
      _
    $region11: #{dnn_forward.1} parent=1 // pred_check_branch
      %30 = sbr.rel (0) target = $region13
    $region12: #{dnn_forward.1} parent=1 // pred_region
      _
    $region13: #{dnn_forward.1} parent=1 // pred_fallthru
      _
    // Predicated region
    $region14: #{dnn_forward.1} parent=1 // pred_check
      _
    $region15: #{dnn_forward.1} parent=1 // pred_check_branch
      %32 = sbr.rel (0) target = $region17
    $region16: #{dnn_forward.1} parent=1 // pred_region
      %s34 = ssub.s32 1024, 1024
      %35 = vsyncadd [#allocation6], %s34
      %s36 = sshll.u32 [#allocation5], 4
      %s37 = int_to_ptr.vmem [resolvable:$true] %s36
      %42 = dma.hbm_to_vmem [thread:$0]  %s3, 1024, %s37, [#allocation6], 64, 64, 4
    $region17: #{dnn_forward.1} parent=1 // pred_fallthru
      _
    // Predicated region
    $region18: #{dnn_forward.1} parent=1 // pred_check
      _
    $region19: #{dnn_forward.1} parent=1 // pred_check_branch
      %44 = sbr.rel (0) target = $region21
    $region20: #{dnn_forward.1} parent=1 // pred_region
      _
    $region21: #{dnn_forward.1} parent=1 // pred_fallthru
      _
    // Predicated region
    $region22: #{dnn_forward.1} parent=1 // pred_check
      _
    $region23: #{dnn_forward.1} parent=1 // pred_check_branch
      %46 = sbr.rel (0) target = $region25
    $region24: #{dnn_forward.1} parent=1 // pred_region
      %s48 = ssub.s32 1024, 1024
      %49 = vsyncadd [#allocation6], %s48
      %s50 = sshll.u32 [#allocation7], 4
      %s51 = int_to_ptr.vmem [resolvable:$true] %s50
      %56 = dma.hbm_to_vmem [thread:$0]  %s5, 1024, %s51, [#allocation6], 64, 64, 4
    $region25: #{dnn_forward.1} parent=1 // pred_fallthru
      _
    // Predicated region
    $region26: #{dnn_forward.1} parent=1 // pred_check
      _
    $region27: #{dnn_forward.1} parent=1 // pred_check_branch
      %58 = sbr.rel (0) target = $region29
    $region28: #{dnn_forward.1} parent=1 // pred_region
      _
    $region29: #{dnn_forward.1} parent=1 // pred_fallthru
      _
    // Predicated region
    $region30: #{dnn_forward.1} parent=1 // pred_check
      _
    $region31: #{dnn_forward.1} parent=1 // pred_check_branch
      %60 = sbr.rel (0) target = $region33
    $region32: #{dnn_forward.1} parent=1 // pred_region
      %61 = dma.done [#allocation3], 1024
    $region33: #{dnn_forward.1} parent=1 // pred_fallthru
      _
    // Predicated region
    $region34: #{dnn_forward.1} parent=1 // pred_check
      _
    $region35: #{dnn_forward.1} parent=1 // pred_check_branch
      %63 = sbr.rel (0) target = $region37
    $region36: #{dnn_forward.1} parent=1 // pred_region
      %64 = dma.done [#allocation6], 1024
    $region37: #{dnn_forward.1} parent=1 // pred_fallthru
      _
    // Predicated region
    $region38: #{dnn_forward.1} parent=1 // pred_check
      _
    $region39: #{dnn_forward.1} parent=1 // pred_check_branch
      %66 = sbr.rel (0) target = $region41
    $region40: #{dnn_forward.1} parent=1 // pred_region
      %67 = dma.done [#allocation6], 1024
    $region41: #{dnn_forward.1} parent=1 // pred_fallthru
      _
    %v69 = vld [vmem:[%s0] sm:$0xff]
    %v70 = vld [vmem:[#allocation2] sm:$0xf]
    %v71 = vld [vmem:[#allocation2 + $0x4] sm:$0xf]
    %v72 = vld [vmem:[#allocation2 + $0x8] sm:$0xf]
    %v73 = vld [vmem:[#allocation2 + $0xc] sm:$0xf]
    %v74 = vld [vmem:[#allocation2 + $0x10] sm:$0xf]
    %v75 = vld [vmem:[#allocation2 + $0x14] sm:$0xf]
    %v76 = vld [vmem:[#allocation2 + $0x18] sm:$0xf]
    %v77 = vld [vmem:[#allocation2 + $0x1c] sm:$0xf]
    %v78 = vld [vmem:[#allocation2 + $0x20] sm:$0xf]
    %v79 = vld [vmem:[#allocation2 + $0x24] sm:$0xf]
    %v80 = vld [vmem:[#allocation2 + $0x28] sm:$0xf]
    %v81 = vld [vmem:[#allocation2 + $0x2c] sm:$0xf]
    %v82 = vld [vmem:[#allocation2 + $0x30] sm:$0xf]
    %v83 = vld [vmem:[#allocation2 + $0x34] sm:$0xf]
    %v84 = vld [vmem:[#allocation2 + $0x38] sm:$0xf]
    %v85 = vld [vmem:[#allocation2 + $0x3c] sm:$0xf]
    %v86 = vld [vmem:[%s2] sm:$0x1]
    %v87 = vpack.c.bf16 %v69, %v69
    %v89 = vlaneseq
    %v90 = vshrl.u32 %v89, 7
    %v91 = vsub.s32 0, %v90
    %v92 = vrot.slane %v86, %v91
    %v110 = vunpack.c.l.b16 %v70
    %v111 = vunpack.c.l.b16 %v71
    %v112 = vunpack.c.l.b16 %v72
    %v113 = vunpack.c.l.b16 %v73
    %v114 = vunpack.c.l.b16 %v74
    %v115 = vunpack.c.l.b16 %v75
    %v116 = vunpack.c.l.b16 %v76
    %v117 = vunpack.c.l.b16 %v77
    %v118 = vunpack.c.l.b16 %v78
    %v119 = vunpack.c.l.b16 %v79
    %v120 = vunpack.c.l.b16 %v80
    %v121 = vunpack.c.l.b16 %v81
    %v122 = vunpack.c.l.b16 %v82
    %v123 = vunpack.c.l.b16 %v83
    %v124 = vunpack.c.l.b16 %v84
    %v125 = vunpack.c.l.b16 %v85
    %v126 = vpack.c.b16 %v111, %v110
    %v127 = vpack.c.b16 %v113, %v112
    %v128 = vpack.c.b16 %v115, %v114
    %v129 = vpack.c.b16 %v117, %v116
    %v130 = vpack.c.b16 %v119, %v118
    %v131 = vpack.c.b16 %v121, %v120
    %v132 = vpack.c.b16 %v123, %v122
    %v133 = vpack.c.b16 %v125, %v124
    %142 = vmatprep.subr.bf16.mxu0 0
    %143 = vmatpush1.bf16.msra.mxu0 %v126
    %144 = vmatprep.subr.bf16.mxu0 0
    %145 = vmatpush1.bf16.msra.mxu0 %v127
    %146 = vmatprep.subr.bf16.mxu0 0
    %147 = vmatpush1.bf16.msra.mxu0 %v128
    %148 = vmatprep.subr.bf16.mxu0 0
    %149 = vmatpush1.bf16.msra.mxu0 %v129
    %150 = vmatprep.subr.bf16.mxu0 0
    %151 = vmatpush1.bf16.msra.mxu0 %v130
    %152 = vmatprep.subr.bf16.mxu0 0
    %153 = vmatpush1.bf16.msra.mxu0 %v131
    %154 = vmatprep.subr.bf16.mxu0 0
    %155 = vmatpush1.bf16.msra.mxu0 %v132
    %156 = vmatprep.subr.bf16.mxu0 0
    %157 = vmatpush1.bf16.msra.mxu0 %v133
    %158 = vmatprep.subr.bf16.mxu0 0
    %159 = vmatpush1.bf16.msra.mxu0 0
    %160 = vmatprep.subr.bf16.mxu0 0
    %161 = vmatpush1.bf16.msra.mxu0 0
    %162 = vmatprep.subr.bf16.mxu0 0
    %163 = vmatpush1.bf16.msra.mxu0 0
    %164 = vmatprep.subr.bf16.mxu0 0
    %165 = vmatpush1.bf16.msra.mxu0 0
    %166 = vmatprep.subr.bf16.mxu0 0
    %167 = vmatpush1.bf16.msra.mxu0 0
    %168 = vmatprep.subr.bf16.mxu0 0
    %169 = vmatpush1.bf16.msra.mxu0 0
    %170 = vmatprep.subr.bf16.mxu0 0
    %171 = vmatpush1.bf16.msra.mxu0 0
    %172 = vmatprep.subr.bf16.mxu0 0
    %173 = vmatpush1.bf16.msra.mxu0 0
    %174 = vmatprep.mubr.bf16.mxu0 0
    %175 = vmatmul.mubr.bf16.gmra.mrb[0].mxu0 %v87
    %v176 = vpop.f32.mrb[0].mxu0
    %v177 = vadd.f32 %v92, %v176
    %v178 = vpop.f32.mrb[0].mxu0
    %v179 = vpop.f32.mrb[0].mxu0
    %v180 = vpop.f32.mrb[0].mxu0
    %181 = vdwg.mxu0
    %v182 = vmax.f32 %v177, 0.0
    %v183 = vld [vmem:[#allocation5] sm:$0xf]
    %v184 = vld [vmem:[#allocation5 + $0x4] sm:$0xf]
    %v185 = vld [vmem:[#allocation5 + $0x8] sm:$0xf]
    %v186 = vld [vmem:[#allocation5 + $0xc] sm:$0xf]
    %v187 = vld [vmem:[#allocation5 + $0x10] sm:$0xf]
    %v188 = vld [vmem:[#allocation5 + $0x14] sm:$0xf]
    %v189 = vld [vmem:[#allocation5 + $0x18] sm:$0xf]
    %v190 = vld [vmem:[#allocation5 + $0x1c] sm:$0xf]
    %v191 = vld [vmem:[#allocation5 + $0x20] sm:$0xf]
    %v192 = vld [vmem:[#allocation5 + $0x24] sm:$0xf]
    %v193 = vld [vmem:[#allocation5 + $0x28] sm:$0xf]
    %v194 = vld [vmem:[#allocation5 + $0x2c] sm:$0xf]
    %v195 = vld [vmem:[#allocation5 + $0x30] sm:$0xf]
    %v196 = vld [vmem:[#allocation5 + $0x34] sm:$0xf]
    %v197 = vld [vmem:[#allocation5 + $0x38] sm:$0xf]
    %v198 = vld [vmem:[#allocation5 + $0x3c] sm:$0xf]
    %v199 = vld [vmem:[%s4] sm:$0x1]
    %v200 = vpack.c.bf16 %v182, %v182
    %v202 = vlaneseq
    %v203 = vshrl.u32 %v202, 7
    %v204 = vsub.s32 0, %v203
    %v205 = vrot.slane %v199, %v204
    %v223 = vunpack.c.l.b16 %v183
    %v224 = vunpack.c.l.b16 %v184
    %v225 = vunpack.c.l.b16 %v185
    %v226 = vunpack.c.l.b16 %v186
    %v227 = vunpack.c.l.b16 %v187
    %v228 = vunpack.c.l.b16 %v188
    %v229 = vunpack.c.l.b16 %v189
    %v230 = vunpack.c.l.b16 %v190
    %v231 = vunpack.c.l.b16 %v191
    %v232 = vunpack.c.l.b16 %v192
    %v233 = vunpack.c.l.b16 %v193
    %v234 = vunpack.c.l.b16 %v194
    %v235 = vunpack.c.l.b16 %v195
    %v236 = vunpack.c.l.b16 %v196
    %v237 = vunpack.c.l.b16 %v197
    %v238 = vunpack.c.l.b16 %v198
    %v239 = vpack.c.b16 %v224, %v223
    %v240 = vpack.c.b16 %v226, %v225
    %v241 = vpack.c.b16 %v228, %v227
    %v242 = vpack.c.b16 %v230, %v229
    %v243 = vpack.c.b16 %v232, %v231
    %v244 = vpack.c.b16 %v234, %v233
    %v245 = vpack.c.b16 %v236, %v235
    %v246 = vpack.c.b16 %v238, %v237
    %255 = vmatprep.subr.bf16.mxu0 0
    %256 = vmatpush1.bf16.msra.mxu0 %v239
    %257 = vmatprep.subr.bf16.mxu0 0
    %258 = vmatpush1.bf16.msra.mxu0 %v240
    %259 = vmatprep.subr.bf16.mxu0 0
    %260 = vmatpush1.bf16.msra.mxu0 %v241
    %261 = vmatprep.subr.bf16.mxu0 0
    %262 = vmatpush1.bf16.msra.mxu0 %v242
    %263 = vmatprep.subr.bf16.mxu0 0
    %264 = vmatpush1.bf16.msra.mxu0 %v243
    %265 = vmatprep.subr.bf16.mxu0 0
    %266 = vmatpush1.bf16.msra.mxu0 %v244
    %267 = vmatprep.subr.bf16.mxu0 0
    %268 = vmatpush1.bf16.msra.mxu0 %v245
    %269 = vmatprep.subr.bf16.mxu0 0
    %270 = vmatpush1.bf16.msra.mxu0 %v246
    %271 = vmatprep.subr.bf16.mxu0 0
    %272 = vmatpush1.bf16.msra.mxu0 0
    %273 = vmatprep.subr.bf16.mxu0 0
    %274 = vmatpush1.bf16.msra.mxu0 0
    %275 = vmatprep.subr.bf16.mxu0 0
    %276 = vmatpush1.bf16.msra.mxu0 0
    %277 = vmatprep.subr.bf16.mxu0 0
    %278 = vmatpush1.bf16.msra.mxu0 0
    %279 = vmatprep.subr.bf16.mxu0 0
    %280 = vmatpush1.bf16.msra.mxu0 0
    %281 = vmatprep.subr.bf16.mxu0 0
    %282 = vmatpush1.bf16.msra.mxu0 0
    %283 = vmatprep.subr.bf16.mxu0 0
    %284 = vmatpush1.bf16.msra.mxu0 0
    %285 = vmatprep.subr.bf16.mxu0 0
    %286 = vmatpush1.bf16.msra.mxu0 0
    %287 = vmatprep.mubr.bf16.mxu0 0
    %288 = vmatmul.mubr.bf16.gmra.mrb[0].mxu0 %v200
    %v289 = vpop.f32.mrb[0].mxu0
    %v290 = vadd.f32 %v205, %v289
    %v291 = vpop.f32.mrb[0].mxu0
    %v292 = vpop.f32.mrb[0].mxu0
    %v293 = vpop.f32.mrb[0].mxu0
    %294 = vdwg.mxu0
    %v295 = vmax.f32 %v290, 0.0
    %v296 = vld [vmem:[#allocation7] sm:$0xf]
    %v297 = vld [vmem:[#allocation7 + $0x4] sm:$0xf]
    %v298 = vld [vmem:[#allocation7 + $0x8] sm:$0xf]
    %v299 = vld [vmem:[#allocation7 + $0xc] sm:$0xf]
    %v300 = vld [vmem:[#allocation7 + $0x10] sm:$0xf]
    %v301 = vld [vmem:[#allocation7 + $0x14] sm:$0xf]
    %v302 = vld [vmem:[#allocation7 + $0x18] sm:$0xf]
    %v303 = vld [vmem:[#allocation7 + $0x1c] sm:$0xf]
    %v304 = vld [vmem:[#allocation7 + $0x20] sm:$0xf]
    %v305 = vld [vmem:[#allocation7 + $0x24] sm:$0xf]
    %v306 = vld [vmem:[#allocation7 + $0x28] sm:$0xf]
    %v307 = vld [vmem:[#allocation7 + $0x2c] sm:$0xf]
    %v308 = vld [vmem:[#allocation7 + $0x30] sm:$0xf]
    %v309 = vld [vmem:[#allocation7 + $0x34] sm:$0xf]
    %v310 = vld [vmem:[#allocation7 + $0x38] sm:$0xf]
    %v311 = vld [vmem:[#allocation7 + $0x3c] sm:$0xf]
    %v312 = vld [vmem:[%s6] sm:$0x1]
    %v313 = vpack.c.bf16 %v295, %v295
    %v315 = vlaneseq
    %v316 = vshrl.u32 %v315, 7
    %v317 = vsub.s32 0, %v316
    %v318 = vrot.slane %v312, %v317
    %v336 = vunpack.c.l.b16 %v296
    %v337 = vunpack.c.l.b16 %v297
    %v338 = vunpack.c.l.b16 %v298
    %v339 = vunpack.c.l.b16 %v299
    %v340 = vunpack.c.l.b16 %v300
    %v341 = vunpack.c.l.b16 %v301
    %v342 = vunpack.c.l.b16 %v302
    %v343 = vunpack.c.l.b16 %v303
    %v344 = vunpack.c.l.b16 %v304
    %v345 = vunpack.c.l.b16 %v305
    %v346 = vunpack.c.l.b16 %v306
    %v347 = vunpack.c.l.b16 %v307
    %v348 = vunpack.c.l.b16 %v308
    %v349 = vunpack.c.l.b16 %v309
    %v350 = vunpack.c.l.b16 %v310
    %v351 = vunpack.c.l.b16 %v311
    %v352 = vpack.c.b16 %v337, %v336
    %v353 = vpack.c.b16 %v339, %v338
    %v354 = vpack.c.b16 %v341, %v340
    %v355 = vpack.c.b16 %v343, %v342
    %v356 = vpack.c.b16 %v345, %v344
    %v357 = vpack.c.b16 %v347, %v346
    %v358 = vpack.c.b16 %v349, %v348
    %v359 = vpack.c.b16 %v351, %v350
    %368 = vmatprep.subr.bf16.mxu0 0
    %369 = vmatpush1.bf16.msra.mxu0 %v352
    %370 = vmatprep.subr.bf16.mxu0 0
    %371 = vmatpush1.bf16.msra.mxu0 %v353
    %372 = vmatprep.subr.bf16.mxu0 0
    %373 = vmatpush1.bf16.msra.mxu0 %v354
    %374 = vmatprep.subr.bf16.mxu0 0
    %375 = vmatpush1.bf16.msra.mxu0 %v355
    %376 = vmatprep.subr.bf16.mxu0 0
    %377 = vmatpush1.bf16.msra.mxu0 %v356
    %378 = vmatprep.subr.bf16.mxu0 0
    %379 = vmatpush1.bf16.msra.mxu0 %v357
    %380 = vmatprep.subr.bf16.mxu0 0
    %381 = vmatpush1.bf16.msra.mxu0 %v358
    %382 = vmatprep.subr.bf16.mxu0 0
    %383 = vmatpush1.bf16.msra.mxu0 %v359
    %384 = vmatprep.subr.bf16.mxu0 0
    %385 = vmatpush1.bf16.msra.mxu0 0
    %386 = vmatprep.subr.bf16.mxu0 0
    %387 = vmatpush1.bf16.msra.mxu0 0
    %388 = vmatprep.subr.bf16.mxu0 0
    %389 = vmatpush1.bf16.msra.mxu0 0
    %390 = vmatprep.subr.bf16.mxu0 0
    %391 = vmatpush1.bf16.msra.mxu0 0
    %392 = vmatprep.subr.bf16.mxu0 0
    %393 = vmatpush1.bf16.msra.mxu0 0
    %394 = vmatprep.subr.bf16.mxu0 0
    %395 = vmatpush1.bf16.msra.mxu0 0
    %396 = vmatprep.subr.bf16.mxu0 0
    %397 = vmatpush1.bf16.msra.mxu0 0
    %398 = vmatprep.subr.bf16.mxu0 0
    %399 = vmatpush1.bf16.msra.mxu0 0
    %400 = vmatprep.mubr.bf16.mxu0 0
    %401 = vmatmul.mubr.bf16.gmra.mrb[0].mxu0 %v313
    %v402 = vpop.f32.mrb[0].mxu0
    %v403 = vadd.f32 %v318, %v402
    %v404 = vpop.f32.mrb[0].mxu0
    %v405 = vpop.f32.mrb[0].mxu0
    %v406 = vpop.f32.mrb[0].mxu0
    %407 = vdwg.mxu0
    %v408 = vmax.f32 %v403, 0.0
    %409 = vst [vmem:[#allocation8] sm:$0xff] %v408
    // Predicated region
    $region42: #{dnn_forward.1} parent=1 // pred_check
      _
    $region43: #{dnn_forward.1} parent=1 // pred_check_branch
      %411 = sbr.rel (0) target = $region45
    $region44: #{dnn_forward.1} parent=1 // pred_region
      %s413 = ssub.s32 128, 128
      %414 = vsyncadd [#allocation4], %s413
      %s416 = sshll.u32 [#allocation8], 4
      %s417 = int_to_ptr.vmem [resolvable:$true] %s416
      %419 = dma.vmem_to_hbm [thread:$0]  %s417, 128, %s7, [#allocation4]
    $region45: #{dnn_forward.1} parent=1 // pred_fallthru
      _
    // Predicated region
    $region46: #{dnn_forward.1} parent=1 // pred_check
      _
    $region47: #{dnn_forward.1} parent=1 // pred_check_branch
      %421 = sbr.rel (0) target = $region49
    $region48: #{dnn_forward.1} parent=1 // pred_region
      %422 = dma.done [#allocation4], 128
    $region49: #{dnn_forward.1} parent=1 // pred_fallthru
      _
    %423 = vsyncpa [#allocation3], 1
    %424 = vsyncpa [#allocation6], 1
    %425 = vsyncpa [#allocation4], 1

// kernel: dnn_forward.1
$region0: #{dnn_forward.1}
  #allocation0 [shape = 'u32[]', space=smem, size = 0x4, offset = 0x4, fixed_abs, tag = 'smem constant byte address 0x4 - core index']
  #allocation1 [shape = 'u32[144,128]{1,0:T(1,128)}', space=vmem, size = 0x12000, scoped, tag = 'internal scratch']
  %s0 = inlined_call_operand.vmem [shape: f32[8,128], index: 0, kind: input, shape index: {}]
  %s1 = inlined_call_operand.hbm [shape: bf16[128,128], index: 1, kind: input, shape index: {}]
  %s2 = inlined_call_operand.vmem [shape: f32[1,128], index: 2, kind: input, shape index: {}]
  %s3 = inlined_call_operand.hbm [shape: bf16[128,128], index: 3, kind: input, shape index: {}]
  %s4 = inlined_call_operand.vmem [shape: f32[1,128], index: 4, kind: input, shape index: {}]
  %s5 = inlined_call_operand.hbm [shape: bf16[128,128], index: 5, kind: input, shape index: {}]
  %s6 = inlined_call_operand.vmem [shape: f32[1,128], index: 6, kind: input, shape index: {}]
  %s7 = inlined_call_operand.hbm [shape: f32[8,128], index: 7, kind: output, shape index: {}]
  %s8 = sld [smem:[#allocation0]]
  $region50: #{dnn_forward.1} parent=0
    _
  %s10 = ssub.s32 1, %s8
  %s11 = scalar_select 0, %s10, %s8
  $region1: #{dnn_forward.1} parent=0
    #allocation2 [shape = 'u8[32768]{0}', space=vmem, size = 0x8000, scoped, tag = 'input window, operand 1, single buffered']
    #allocation3 [shape = 's32[1]{0}', space=sflag, size = 0x4, scoped, tag = 'scoped memory for dnn_forward.1']
    #allocation4 [shape = 's32[1]{0}', space=sflag, size = 0x4, scoped, tag = 'scoped memory for dnn_forward.1']
    #allocation5 [shape = 'u8[32768]{0}', space=vmem, size = 0x8000, scoped, tag = 'input window, operand 3, single buffered']
    #allocation6 [shape = 's32[1]{0}', space=sflag, size = 0x4, scoped, tag = 'scoped memory for dnn_forward.1']
    #allocation7 [shape = 'u8[32768]{0}', space=vmem, size = 0x8000, scoped, tag = 'input window, operand 5, single buffered']
    #allocation8 [shape = 'u8[4096]{0}', space=vmem, size = 0x1000, scoped, tag = 'output window, operand 0, single buffered']
    %12 = vsyncpa [#allocation3], 0
    %13 = vsyncpa [#allocation6], 0
    %14 = vsyncpa [#allocation4], 0
    // Predicated region
    $region2: #{dnn_forward.1} parent=1 // pred_check
      _
    $region3: #{dnn_forward.1} parent=1 // pred_check_branch
      %16 = sbr.rel (0) target = $region5
    $region4: #{dnn_forward.1} parent=1 // pred_region
      _
    $region5: #{dnn_forward.1} parent=1 // pred_fallthru
      _
    // Predicated region
    $region6: #{dnn_forward.1} parent=1 // pred_check
      _
    $region7: #{dnn_forward.1} parent=1 // pred_check_branch
      %18 = sbr.rel (0) target = $region9
    $region8: #{dnn_forward.1} parent=1 // pred_region
      %s20 = ssub.s32 1024, 1024
      %21 = vsyncadd [#allocation3], %s20
      %s22 = sshll.u32 [#allocation2], 4
      %s23 = int_to_ptr.vmem [resolvable:$true] %s22
      %28 = dma.hbm_to_vmem [thread:$0]  %s1, 1024, %s23, [#allocation3], 64, 64, 4
    $region9: #{dnn_forward.1} parent=1 // pred_fallthru
      _
    // Predicated region
    $region10: #{dnn_forward.1} parent=1 // pred_check
      _
    $region11: #{dnn_forward.1} parent=1 // pred_check_branch
      %30 = sbr.rel (0) target = $region13
    $region12: #{dnn_forward.1} parent=1 // pred_region
      _
    $region13: #{dnn_forward.1} parent=1 // pred_fallthru
      _
    // Predicated region
    $region14: #{dnn_forward.1} parent=1 // pred_check
      _
    $region15: #{dnn_forward.1} parent=1 // pred_check_branch
      %32 = sbr.rel (0) target = $region17
    $region16: #{dnn_forward.1} parent=1 // pred_region
      %s34 = ssub.s32 1024, 1024
      %35 = vsyncadd [#allocation6], %s34
      %s36 = sshll.u32 [#allocation5], 4
      %s37 = int_to_ptr.vmem [resolvable:$true] %s36
      %42 = dma.hbm_to_vmem [thread:$0]  %s3, 1024, %s37, [#allocation6], 64, 64, 4
    $region17: #{dnn_forward.1} parent=1 // pred_fallthru
      _
    // Predicated region
    $region18: #{dnn_forward.1} parent=1 // pred_check
      _
    $region19: #{dnn_forward.1} parent=1 // pred_check_branch
      %44 = sbr.rel (0) target = $region21
    $region20: #{dnn_forward.1} parent=1 // pred_region
      _
    $region21: #{dnn_forward.1} parent=1 // pred_fallthru
      _
    // Predicated region
    $region22: #{dnn_forward.1} parent=1 // pred_check
      _
    $region23: #{dnn_forward.1} parent=1 // pred_check_branch
      %46 = sbr.rel (0) target = $region25
    $region24: #{dnn_forward.1} parent=1 // pred_region
      %s48 = ssub.s32 1024, 1024
      %49 = vsyncadd [#allocation6], %s48
      %s50 = sshll.u32 [#allocation7], 4
      %s51 = int_to_ptr.vmem [resolvable:$true] %s50
      %56 = dma.hbm_to_vmem [thread:$0]  %s5, 1024, %s51, [#allocation6], 64, 64, 4
    $region25: #{dnn_forward.1} parent=1 // pred_fallthru
      _
    // Predicated region
    $region26: #{dnn_forward.1} parent=1 // pred_check
      _
    $region27: #{dnn_forward.1} parent=1 // pred_check_branch
      %58 = sbr.rel (0) target = $region29
    $region28: #{dnn_forward.1} parent=1 // pred_region
      _
    $region29: #{dnn_forward.1} parent=1 // pred_fallthru
      _
    // Predicated region
    $region30: #{dnn_forward.1} parent=1 // pred_check
      _
    $region31: #{dnn_forward.1} parent=1 // pred_check_branch
      %60 = sbr.rel (0) target = $region33
    $region32: #{dnn_forward.1} parent=1 // pred_region
      %61 = dma.done [#allocation3], 1024
    $region33: #{dnn_forward.1} parent=1 // pred_fallthru
      _
    // Predicated region
    $region34: #{dnn_forward.1} parent=1 // pred_check
      _
    $region35: #{dnn_forward.1} parent=1 // pred_check_branch
      %63 = sbr.rel (0) target = $region37
    $region36: #{dnn_forward.1} parent=1 // pred_region
      %64 = dma.done [#allocation6], 1024
    $region37: #{dnn_forward.1} parent=1 // pred_fallthru
      _
    // Predicated region
    $region38: #{dnn_forward.1} parent=1 // pred_check
      _
    $region39: #{dnn_forward.1} parent=1 // pred_check_branch
      %66 = sbr.rel (0) target = $region41
    $region40: #{dnn_forward.1} parent=1 // pred_region
      %67 = dma.done [#allocation6], 1024
    $region41: #{dnn_forward.1} parent=1 // pred_fallthru
      _
    %v69 = vld [vmem:[%s0] sm:$0xff]
    %v70 = vld [vmem:[#allocation2] sm:$0xf]
    %v71 = vld [vmem:[#allocation2 + $0x4] sm:$0xf]
    %v72 = vld [vmem:[#allocation2 + $0x8] sm:$0xf]
    %v73 = vld [vmem:[#allocation2 + $0xc] sm:$0xf]
    %v74 = vld [vmem:[#allocation2 + $0x10] sm:$0xf]
    %v75 = vld [vmem:[#allocation2 + $0x14] sm:$0xf]
    %v76 = vld [vmem:[#allocation2 + $0x18] sm:$0xf]
    %v77 = vld [vmem:[#allocation2 + $0x1c] sm:$0xf]
    %v78 = vld [vmem:[#allocation2 + $0x20] sm:$0xf]
    %v79 = vld [vmem:[#allocation2 + $0x24] sm:$0xf]
    %v80 = vld [vmem:[#allocation2 + $0x28] sm:$0xf]
    %v81 = vld [vmem:[#allocation2 + $0x2c] sm:$0xf]
    %v82 = vld [vmem:[#allocation2 + $0x30] sm:$0xf]
    %v83 = vld [vmem:[#allocation2 + $0x34] sm:$0xf]
    %v84 = vld [vmem:[#allocation2 + $0x38] sm:$0xf]
    %v85 = vld [vmem:[#allocation2 + $0x3c] sm:$0xf]
    %v86 = vld [vmem:[%s2] sm:$0x1]
    %v87 = vpack.c.bf16 %v69, %v69
    %v89 = vlaneseq
    %v90 = vshrl.u32 %v89, 7
    %v91 = vsub.s32 0, %v90
    %v92 = vrot.slane %v86, %v91
    %v110 = vunpack.c.l.b16 %v70
    %v111 = vunpack.c.l.b16 %v71
    %v112 = vunpack.c.l.b16 %v72
    %v113 = vunpack.c.l.b16 %v73
    %v114 = vunpack.c.l.b16 %v74
    %v115 = vunpack.c.l.b16 %v75
    %v116 = vunpack.c.l.b16 %v76
    %v117 = vunpack.c.l.b16 %v77
    %v118 = vunpack.c.l.b16 %v78
    %v119 = vunpack.c.l.b16 %v79
    %v120 = vunpack.c.l.b16 %v80
    %v121 = vunpack.c.l.b16 %v81
    %v122 = vunpack.c.l.b16 %v82
    %v123 = vunpack.c.l.b16 %v83
    %v124 = vunpack.c.l.b16 %v84
    %v125 = vunpack.c.l.b16 %v85
    %v126 = vpack.c.b16 %v111, %v110
    %v127 = vpack.c.b16 %v113, %v112
    %v128 = vpack.c.b16 %v115, %v114
    %v129 = vpack.c.b16 %v117, %v116
    %v130 = vpack.c.b16 %v119, %v118
    %v131 = vpack.c.b16 %v121, %v120
    %v132 = vpack.c.b16 %v123, %v122
    %v133 = vpack.c.b16 %v125, %v124
    %142 = vmatprep.subr.bf16.mxu0 0
    %143 = vmatpush1.bf16.msra.mxu0 %v126
    %144 = vmatprep.subr.bf16.mxu0 0
    %145 = vmatpush1.bf16.msra.mxu0 %v127
    %146 = vmatprep.subr.bf16.mxu0 0
    %147 = vmatpush1.bf16.msra.mxu0 %v128
    %148 = vmatprep.subr.bf16.mxu0 0
    %149 = vmatpush1.bf16.msra.mxu0 %v129
    %150 = vmatprep.subr.bf16.mxu0 0
    %151 = vmatpush1.bf16.msra.mxu0 %v130
    %152 = vmatprep.subr.bf16.mxu0 0
    %153 = vmatpush1.bf16.msra.mxu0 %v131
    %154 = vmatprep.subr.bf16.mxu0 0
    %155 = vmatpush1.bf16.msra.mxu0 %v132
    %156 = vmatprep.subr.bf16.mxu0 0
    %157 = vmatpush1.bf16.msra.mxu0 %v133
    %158 = vmatprep.subr.bf16.mxu0 0
    %159 = vmatpush1.bf16.msra.mxu0 0
    %160 = vmatprep.subr.bf16.mxu0 0
    %161 = vmatpush1.bf16.msra.mxu0 0
    %162 = vmatprep.subr.bf16.mxu0 0
    %163 = vmatpush1.bf16.msra.mxu0 0
    %164 = vmatprep.subr.bf16.mxu0 0
    %165 = vmatpush1.bf16.msra.mxu0 0
    %166 = vmatprep.subr.bf16.mxu0 0
    %167 = vmatpush1.bf16.msra.mxu0 0
    %168 = vmatprep.subr.bf16.mxu0 0
    %169 = vmatpush1.bf16.msra.mxu0 0
    %170 = vmatprep.subr.bf16.mxu0 0
    %171 = vmatpush1.bf16.msra.mxu0 0
    %172 = vmatprep.subr.bf16.mxu0 0
    %173 = vmatpush1.bf16.msra.mxu0 0
    %174 = vmatprep.mubr.bf16.mxu0 0
    %175 = vmatmul.mubr.bf16.gmra.mrb[0].mxu0 %v87
    %v176 = vpop.f32.mrb[0].mxu0
    %v177 = vadd.f32 %v92, %v176
    %v178 = vpop.f32.mrb[0].mxu0
    %v179 = vpop.f32.mrb[0].mxu0
    %v180 = vpop.f32.mrb[0].mxu0
    %181 = vdwg.mxu0
    %v182 = vmax.f32 %v177, 0.0
    %v183 = vld [vmem:[#allocation5] sm:$0xf]
    %v184 = vld [vmem:[#allocation5 + $0x4] sm:$0xf]
    %v185 = vld [vmem:[#allocation5 + $0x8] sm:$0xf]
    %v186 = vld [vmem:[#allocation5 + $0xc] sm:$0xf]
    %v187 = vld [vmem:[#allocation5 + $0x10] sm:$0xf]
    %v188 = vld [vmem:[#allocation5 + $0x14] sm:$0xf]
    %v189 = vld [vmem:[#allocation5 + $0x18] sm:$0xf]
    %v190 = vld [vmem:[#allocation5 + $0x1c] sm:$0xf]
    %v191 = vld [vmem:[#allocation5 + $0x20] sm:$0xf]
    %v192 = vld [vmem:[#allocation5 + $0x24] sm:$0xf]
    %v193 = vld [vmem:[#allocation5 + $0x28] sm:$0xf]
    %v194 = vld [vmem:[#allocation5 + $0x2c] sm:$0xf]
    %v195 = vld [vmem:[#allocation5 + $0x30] sm:$0xf]
    %v196 = vld [vmem:[#allocation5 + $0x34] sm:$0xf]
    %v197 = vld [vmem:[#allocation5 + $0x38] sm:$0xf]
    %v198 = vld [vmem:[#allocation5 + $0x3c] sm:$0xf]
    %v199 = vld [vmem:[%s4] sm:$0x1]
    %v200 = vpack.c.bf16 %v182, %v182
    %v202 = vlaneseq
    %v203 = vshrl.u32 %v202, 7
    %v204 = vsub.s32 0, %v203
    %v205 = vrot.slane %v199, %v204
    %v223 = vunpack.c.l.b16 %v183
    %v224 = vunpack.c.l.b16 %v184
    %v225 = vunpack.c.l.b16 %v185
    %v226 = vunpack.c.l.b16 %v186
    %v227 = vunpack.c.l.b16 %v187
    %v228 = vunpack.c.l.b16 %v188
    %v229 = vunpack.c.l.b16 %v189
    %v230 = vunpack.c.l.b16 %v190
    %v231 = vunpack.c.l.b16 %v191
    %v232 = vunpack.c.l.b16 %v192
    %v233 = vunpack.c.l.b16 %v193
    %v234 = vunpack.c.l.b16 %v194
    %v235 = vunpack.c.l.b16 %v195
    %v236 = vunpack.c.l.b16 %v196
    %v237 = vunpack.c.l.b16 %v197
    %v238 = vunpack.c.l.b16 %v198
    %v239 = vpack.c.b16 %v224, %v223
    %v240 = vpack.c.b16 %v226, %v225
    %v241 = vpack.c.b16 %v228, %v227
    %v242 = vpack.c.b16 %v230, %v229
    %v243 = vpack.c.b16 %v232, %v231
    %v244 = vpack.c.b16 %v234, %v233
    %v245 = vpack.c.b16 %v236, %v235
    %v246 = vpack.c.b16 %v238, %v237
    %255 = vmatprep.subr.bf16.mxu0 0
    %256 = vmatpush1.bf16.msra.mxu0 %v239
    %257 = vmatprep.subr.bf16.mxu0 0
    %258 = vmatpush1.bf16.msra.mxu0 %v240
    %259 = vmatprep.subr.bf16.mxu0 0
    %260 = vmatpush1.bf16.msra.mxu0 %v241
    %261 = vmatprep.subr.bf16.mxu0 0
    %262 = vmatpush1.bf16.msra.mxu0 %v242
    %263 = vmatprep.subr.bf16.mxu0 0
    %264 = vmatpush1.bf16.msra.mxu0 %v243
    %265 = vmatprep.subr.bf16.mxu0 0
    %266 = vmatpush1.bf16.msra.mxu0 %v244
    %267 = vmatprep.subr.bf16.mxu0 0
    %268 = vmatpush1.bf16.msra.mxu0 %v245
    %269 = vmatprep.subr.bf16.mxu0 0
    %270 = vmatpush1.bf16.msra.mxu0 %v246
    %271 = vmatprep.subr.bf16.mxu0 0
    %272 = vmatpush1.bf16.msra.mxu0 0
    %273 = vmatprep.subr.bf16.mxu0 0
    %274 = vmatpush1.bf16.msra.mxu0 0
    %275 = vmatprep.subr.bf16.mxu0 0
    %276 = vmatpush1.bf16.msra.mxu0 0
    %277 = vmatprep.subr.bf16.mxu0 0
    %278 = vmatpush1.bf16.msra.mxu0 0
    %279 = vmatprep.subr.bf16.mxu0 0
    %280 = vmatpush1.bf16.msra.mxu0 0
    %281 = vmatprep.subr.bf16.mxu0 0
    %282 = vmatpush1.bf16.msra.mxu0 0
    %283 = vmatprep.subr.bf16.mxu0 0
    %284 = vmatpush1.bf16.msra.mxu0 0
    %285 = vmatprep.subr.bf16.mxu0 0
    %286 = vmatpush1.bf16.msra.mxu0 0
    %287 = vmatprep.mubr.bf16.mxu0 0
    %288 = vmatmul.mubr.bf16.gmra.mrb[0].mxu0 %v200
    %v289 = vpop.f32.mrb[0].mxu0
    %v290 = vadd.f32 %v205, %v289
    %v291 = vpop.f32.mrb[0].mxu0
    %v292 = vpop.f32.mrb[0].mxu0
    %v293 = vpop.f32.mrb[0].mxu0
    %294 = vdwg.mxu0
    %v295 = vmax.f32 %v290, 0.0
    %v296 = vld [vmem:[#allocation7] sm:$0xf]
    %v297 = vld [vmem:[#allocation7 + $0x4] sm:$0xf]
    %v298 = vld [vmem:[#allocation7 + $0x8] sm:$0xf]
    %v299 = vld [vmem:[#allocation7 + $0xc] sm:$0xf]
    %v300 = vld [vmem:[#allocation7 + $0x10] sm:$0xf]
    %v301 = vld [vmem:[#allocation7 + $0x14] sm:$0xf]
    %v302 = vld [vmem:[#allocation7 + $0x18] sm:$0xf]
    %v303 = vld [vmem:[#allocation7 + $0x1c] sm:$0xf]
    %v304 = vld [vmem:[#allocation7 + $0x20] sm:$0xf]
    %v305 = vld [vmem:[#allocation7 + $0x24] sm:$0xf]
    %v306 = vld [vmem:[#allocation7 + $0x28] sm:$0xf]
    %v307 = vld [vmem:[#allocation7 + $0x2c] sm:$0xf]
    %v308 = vld [vmem:[#allocation7 + $0x30] sm:$0xf]
    %v309 = vld [vmem:[#allocation7 + $0x34] sm:$0xf]
    %v310 = vld [vmem:[#allocation7 + $0x38] sm:$0xf]
    %v311 = vld [vmem:[#allocation7 + $0x3c] sm:$0xf]
    %v312 = vld [vmem:[%s6] sm:$0x1]
    %v313 = vpack.c.bf16 %v295, %v295
    %v315 = vlaneseq
    %v316 = vshrl.u32 %v315, 7
    %v317 = vsub.s32 0, %v316
    %v318 = vrot.slane %v312, %v317
    %v336 = vunpack.c.l.b16 %v296
    %v337 = vunpack.c.l.b16 %v297
    %v338 = vunpack.c.l.b16 %v298
    %v339 = vunpack.c.l.b16 %v299
    %v340 = vunpack.c.l.b16 %v300
    %v341 = vunpack.c.l.b16 %v301
    %v342 = vunpack.c.l.b16 %v302
    %v343 = vunpack.c.l.b16 %v303
    %v344 = vunpack.c.l.b16 %v304
    %v345 = vunpack.c.l.b16 %v305
    %v346 = vunpack.c.l.b16 %v306
    %v347 = vunpack.c.l.b16 %v307
    %v348 = vunpack.c.l.b16 %v308
    %v349 = vunpack.c.l.b16 %v309
    %v350 = vunpack.c.l.b16 %v310
    %v351 = vunpack.c.l.b16 %v311
    %v352 = vpack.c.b16 %v337, %v336
    %v353 = vpack.c.b16 %v339, %v338
    %v354 = vpack.c.b16 %v341, %v340
    %v355 = vpack.c.b16 %v343, %v342
    %v356 = vpack.c.b16 %v345, %v344
    %v357 = vpack.c.b16 %v347, %v346
    %v358 = vpack.c.b16 %v349, %v348
    %v359 = vpack.c.b16 %v351, %v350
    %368 = vmatprep.subr.bf16.mxu0 0
    %369 = vmatpush1.bf16.msra.mxu0 %v352
    %370 = vmatprep.subr.bf16.mxu0 0
    %371 = vmatpush1.bf16.msra.mxu0 %v353
    %372 = vmatprep.subr.bf16.mxu0 0
    %373 = vmatpush1.bf16.msra.mxu0 %v354
    %374 = vmatprep.subr.bf16.mxu0 0
    %375 = vmatpush1.bf16.msra.mxu0 %v355
    %376 = vmatprep.subr.bf16.mxu0 0
    %377 = vmatpush1.bf16.msra.mxu0 %v356
    %378 = vmatprep.subr.bf16.mxu0 0
    %379 = vmatpush1.bf16.msra.mxu0 %v357
    %380 = vmatprep.subr.bf16.mxu0 0
    %381 = vmatpush1.bf16.msra.mxu0 %v358
    %382 = vmatprep.subr.bf16.mxu0 0
    %383 = vmatpush1.bf16.msra.mxu0 %v359
    %384 = vmatprep.subr.bf16.mxu0 0
    %385 = vmatpush1.bf16.msra.mxu0 0
    %386 = vmatprep.subr.bf16.mxu0 0
    %387 = vmatpush1.bf16.msra.mxu0 0
    %388 = vmatprep.subr.bf16.mxu0 0
    %389 = vmatpush1.bf16.msra.mxu0 0
    %390 = vmatprep.subr.bf16.mxu0 0
    %391 = vmatpush1.bf16.msra.mxu0 0
    %392 = vmatprep.subr.bf16.mxu0 0
    %393 = vmatpush1.bf16.msra.mxu0 0
    %394 = vmatprep.subr.bf16.mxu0 0
    %395 = vmatpush1.bf16.msra.mxu0 0
    %396 = vmatprep.subr.bf16.mxu0 0
    %397 = vmatpush1.bf16.msra.mxu0 0
    %398 = vmatprep.subr.bf16.mxu0 0
    %399 = vmatpush1.bf16.msra.mxu0 0
    %400 = vmatprep.mubr.bf16.mxu0 0
    %401 = vmatmul.mubr.bf16.gmra.mrb[0].mxu0 %v313
    %v402 = vpop.f32.mrb[0].mxu0
    %v403 = vadd.f32 %v318, %v402
    %v404 = vpop.f32.mrb[0].mxu0
    %v405 = vpop.f32.mrb[0].mxu0
    %v406 = vpop.f32.mrb[0].mxu0
    %407 = vdwg.mxu0
    %v408 = vmax.f32 %v403, 0.0
    %409 = vst [vmem:[#allocation8] sm:$0xff] %v408
    // Predicated region
    $region42: #{dnn_forward.1} parent=1 // pred_check
      _
    $region43: #{dnn_forward.1} parent=1 // pred_check_branch
      %411 = sbr.rel (0) target = $region45
    $region44: #{dnn_forward.1} parent=1 // pred_region
      %s413 = ssub.s32 128, 128
      %414 = vsyncadd [#allocation4], %s413
      %s416 = sshll.u32 [#allocation8], 4
      %s417 = int_to_ptr.vmem [resolvable:$true] %s416
      %419 = dma.vmem_to_hbm [thread:$0]  %s417, 128, %s7, [#allocation4]
    $region45: #{dnn_forward.1} parent=1 // pred_fallthru
      _
    // Predicated region
    $region46: #{dnn_forward.1} parent=1 // pred_check
      _
    $region47: #{dnn_forward.1} parent=1 // pred_check_branch
      %421 = sbr.rel (0) target = $region49
    $region48: #{dnn_forward.1} parent=1 // pred_region
      %422 = dma.done [#allocation4], 128
    $region49: #{dnn_forward.1} parent=1 // pred_fallthru
      _
    %423 = vsyncpa [#allocation3], 1
    %424 = vsyncpa [#allocation6], 1
    %425 = vsyncpa [#allocation4], 1

</llo_original>
